<compile_context>
chip_gen: v7x
topology: tpu7x:2x2x1
jax: 0.10.0
libtpu: 0.0.40
codegen_flags: <defaults>
</compile_context>

<pallas_src>
import functools

import jax
import jax.numpy as jnp
from jax.experimental import pallas as pl
from jax.experimental.pallas import tpu as pltpu

_EPS = 1e-5  # nn.InstanceNorm2d default


def _tpu_vmem_capacity_bytes():
    try:
        return int(pltpu.get_tpu_info().vmem_capacity_bytes)
    except Exception:
        return 64 << 20  # conservative (v7x per-TC VMEM)


# --------------------------------------------------------------------------
# Main path: rows = B*C on sublanes, full H*W on lanes.
# --------------------------------------------------------------------------
def _adain_rows_kernel(img_ref, fb_ref, out_ref, *, hw, tr, eps, fb_resident):
    # img_ref: (TR, HW)   fb_ref: (n_pad, 2) resident OR (TR, 2) per-step
    if fb_resident:
        row0 = pl.multiple_of(pl.program_id(0) * tr, 8)
        fb = fb_ref[pl.ds(row0, tr), :].astype(jnp.float32)
    else:
        fb = fb_ref[...].astype(jnp.float32)
    fac = fb[:, 0:1]
    bias = fb[:, 1:2]

    x = img_ref[...].astype(jnp.float32)
    inv_hw = jnp.float32(1.0 / hw)

    # Two-pass statistics (rows fully VMEM-resident): mean, then E[(x-mean)^2].
    mean = jnp.sum(x, axis=-1, keepdims=True) * inv_hw
    d = x - mean
    var = jnp.sum(d * d, axis=-1, keepdims=True) * inv_hw
    inv_std = jax.lax.rsqrt(var + jnp.float32(eps))

    # Fold normalization + style into a single per-element FMA.
    scale = inv_std * fac                     # (TR, 1)
    shift = bias - mean * scale               # (TR, 1)
    out_ref[...] = (x * scale + shift).astype(out_ref.dtype)


# --------------------------------------------------------------------------
# Large-H*W path: kernel 1 = per-row stats over an HW-tiled reduction axis.
# --------------------------------------------------------------------------
def _stats_kernel(img_ref, stat_ref, s_acc, s2_acc, *, hw, hwt, eps):
    k = pl.program_id(1)

    @pl.when(k == 0)
    def _():
        s_acc[...] = jnp.zeros_like(s_acc)
        s2_acc[...] = jnp.zeros_like(s2_acc)

    x = img_ref[...].astype(jnp.float32)      # (TR, HWT)
    if hw % hwt != 0:
        # Mask padded columns of the ragged last HW tile.
        col = k * hwt + jax.lax.broadcasted_iota(jnp.int32, x.shape, 1)
        x = jnp.where(col < hw, x, jnp.float32(0.0))

    s_acc[...] += jnp.sum(x, axis=-1, keepdims=True)
    s2_acc[...] += jnp.sum(x * x, axis=-1, keepdims=True)

    @pl.when(k == pl.num_programs(1) - 1)
    def _():
        inv_hw = jnp.float32(1.0 / hw)
        mean = s_acc[...] * inv_hw
        var = jnp.maximum(s2_acc[...] * inv_hw - mean * mean, 0.0)
        stat_ref[:, 0:1] = mean
        stat_ref[:, 1:2] = jax.lax.rsqrt(var + jnp.float32(eps))


# Large-H*W path: kernel 2 = per-element FMA with precomputed scale/shift.
def _apply_kernel(img_ref, ss_ref, out_ref):
    ss = ss_ref[...].astype(jnp.float32)      # (TR, 2) [scale, shift]
    x = img_ref[...].astype(jnp.float32)
    out_ref[...] = (x * ss[:, 0:1] + ss[:, 1:2]).astype(out_ref.dtype)


def adain(image, style, *, max_block_bytes=None, min_grid_steps=8):
    """image: [B, C, H, W]; style: [B, 2C, 1, 1] (or [B, 2C])."""
    B, C, H, W = image.shape
    HW = H * W
    N = B * C

    style2d = style.reshape(B, -1)
    assert style2d.shape[1] == 2 * C, "style must carry 2*C channels"
    factor = style2d[:, :C].reshape(N, 1).astype(jnp.float32)
    bias = style2d[:, C:].reshape(N, 1).astype(jnp.float32)
    fb = jnp.concatenate([factor, bias], axis=1)                 # (N, 2)

    img2 = image.reshape(N, HW)                                  # rows on sublanes

    itemsize = jnp.dtype(image.dtype).itemsize
    vmem_cap = _tpu_vmem_capacity_bytes()
    if max_block_bytes is None:
        # v5e/v6e (128 MiB physical VMEM): 4 MiB blocks; v7x (64 MiB): 3 MiB.
        max_block_bytes = (4 << 20) if vmem_cap >= (100 << 20) else (3 << 20)
    vmem_cap_limit = int(0.85 * vmem_cap)

    bytes_per_row = HW * itemsize

    # ---------------------------------------------------------------- main path
    if 8 * bytes_per_row <= max_block_bytes:
        rows_budget = (max_block_bytes // bytes_per_row) // 8 * 8
        # Enforce enough grid steps for double-buffering / megacore whenever N allows.
        rows_for_steps = max(8, (N // min_grid_steps) // 8 * 8)
        n_pad8 = pl.cdiv(N, 8) * 8
        TR = max(8, min(rows_budget, rows_for_steps, n_pad8))
        n_steps = pl.cdiv(N, TR)
        n_pad = n_steps * TR
        if n_pad != N:
            fb = jnp.pad(fb, ((0, n_pad - N), (0, 0)))

        # factor/bias: keep the whole table resident if its padded VMEM
        # footprint is small; otherwise fall back to per-step (TR,2) blocks.
        fb_vmem = pl.cdiv(n_pad, 8) * 8 * 128 * 4   # lane-padded footprint
        fb_resident = fb_vmem <= (2 << 20)
        if fb_resident:
            fb_spec = pl.BlockSpec((n_pad, 2), lambda r: (0, 0))
            fb_cost = fb_vmem
        else:
            fb_spec = pl.BlockSpec((TR, 2), lambda r: (r, 0))
            fb_cost = 2 * TR * 128 * 4

        block_io = TR * HW * itemsize
        est = 2 * (2 * block_io) + 2 * TR * HW * 4 + fb_cost + (4 << 20)
        vmem_limit = min(max(est, 32 << 20), vmem_cap_limit)

        kernel = functools.partial(
            _adain_rows_kernel, hw=HW, tr=TR, eps=_EPS, fb_resident=fb_resident)

        out = pl.pallas_call(
            kernel,
            out_shape=jax.ShapeDtypeStruct((N, HW), image.dtype),
            grid_spec=pltpu.PrefetchScalarGridSpec(
                num_scalar_prefetch=0,
                grid=(n_steps,),
                in_specs=[
                    pl.BlockSpec((TR, HW), lambda r: (r, 0)),
                    fb_spec,
                ],
                out_specs=pl.BlockSpec((TR, HW), lambda r: (r, 0)),
            ),
            compiler_params=pltpu.CompilerParams(
                dimension_semantics=("parallel",),
                vmem_limit_bytes=vmem_limit,
            ),
        )(img2, fb)
        return out.reshape(B, C, H, W)

    # ------------------------------------------------------------ large-HW path
    TR = 8
    HWT = max(128, (max_block_bytes // (TR * itemsize)) // 128 * 128)
    n_r = pl.cdiv(N, TR)
    n_k = pl.cdiv(HW, HWT)

    block_in = TR * HWT * itemsize
    est_stats = 2 * block_in + 2 * TR * HWT * 4 + (4 << 20)
    vmem_limit_stats = min(max(est_stats, 32 << 20), vmem_cap_limit)

    stats = pl.pallas_call(
        functools.partial(_stats_kernel, hw=HW, hwt=HWT, eps=_EPS),
        out_shape=jax.ShapeDtypeStruct((N, 2), jnp.float32),
        grid_spec=pltpu.PrefetchScalarGridSpec(
            num_scalar_prefetch=0,
            grid=(n_r, n_k),
            in_specs=[pl.BlockSpec((TR, HWT), lambda r, k: (r, k))],
            out_specs=pl.BlockSpec((TR, 2), lambda r, k: (r, 0)),
            scratch_shapes=[pltpu.VMEM((TR, 1), jnp.float32),
                            pltpu.VMEM((TR, 1), jnp.float32)],
        ),
        compiler_params=pltpu.CompilerParams(
            dimension_semantics=("parallel", "arbitrary"),
            vmem_limit_bytes=vmem_limit_stats,
        ),
    )(img2)

    # Fold per-row stats with style into one (scale, shift) pair — tiny jnp op.
    mean = stats[:, 0:1]
    rstd = stats[:, 1:2]
    scale = rstd * factor
    shift = bias - mean * scale
    ss = jnp.concatenate([scale, shift], axis=1)                 # (N, 2)

    est_apply = 4 * block_in + 2 * TR * HWT * 4 + (4 << 20)
    vmem_limit_apply = min(max(est_apply, 32 << 20), vmem_cap_limit)

    out = pl.pallas_call(
        _apply_kernel,
        out_shape=jax.ShapeDtypeStruct((N, HW), image.dtype),
        grid_spec=pltpu.PrefetchScalarGridSpec(
            num_scalar_prefetch=0,
            grid=(n_r, n_k),
            in_specs=[pl.BlockSpec((TR, HWT), lambda r, k: (r, k)),
                      pl.BlockSpec((TR, 2), lambda r, k: (r, 0))],
            out_specs=pl.BlockSpec((TR, HWT), lambda r, k: (r, k)),
        ),
        compiler_params=pltpu.CompilerParams(
            dimension_semantics=("parallel", "parallel"),
            vmem_limit_bytes=vmem_limit_apply,
        ),
    )(img2, ss)
    return out.reshape(B, C, H, W)


def _adain_ref(image, style):
    B, C, H, W = image.shape
    style2d = style.reshape(B, -1)
    factor = style2d[:, :C].reshape(B, C, 1, 1)
    bias = style2d[:, C:].reshape(B, C, 1, 1)
    x = image.astype(jnp.float32)
    mean = jnp.mean(x, axis=(2, 3), keepdims=True)
    var = jnp.mean((x - mean) ** 2, axis=(2, 3), keepdims=True)
    norm = (x - mean) / jnp.sqrt(var + _EPS)
    return (norm * factor + bias).astype(image.dtype)


if __name__ == "__main__":
    key = jax.random.PRNGKey(0)
    k_img, k_style, k_img2, k_img3 = jax.random.split(key, 4)

    # Primary check: resident-row (main) path at the module's natural small shape.
    B, C, H, W = 2, 4, 16, 16
    image = jax.random.normal(k_img, (B, C, H, W), dtype=jnp.float32)
    style = jax.random.normal(k_style, (B, 2 * C, 1, 1), dtype=jnp.float32)
    out = adain(image, style)
    jax.block_until_ready(out)
    ref = _adain_ref(image, style)
    assert out.shape == (B, C, H, W)
    assert jnp.allclose(out, ref, atol=1e-4, rtol=1e-4)

    # Exercise the HW-tiled two-kernel path (forced via a tiny block budget),
    # divisible HW tiles.
    image2 = jax.random.normal(k_img2, (B, C, 32, 32), dtype=jnp.float32)
    out2 = adain(image2, style, max_block_bytes=16 * 1024)
    jax.block_until_ready(out2)
    ref2 = _adain_ref(image2, style)
    assert jnp.allclose(out2, ref2, atol=1e-4, rtol=1e-4)

    # Exercise the HW-tiled path with a ragged last HW tile (masked reduction).
    image3 = jax.random.normal(k_img3, (B, C, 20, 20), dtype=jnp.float32)
    out3 = adain(image3, style, max_block_bytes=8 * 1024)
    jax.block_until_ready(out3)
    ref3 = _adain_ref(image3, style)
    assert jnp.allclose(out3, ref3, atol=1e-4, rtol=1e-4)

    print("KERNEL_OK")
</pallas_src>

<mosaic_0001>
module attributes {stable_mosaic.version = 11 : i64} {
  func.func @_adain_rows_kernel(%arg0: i32, %arg1: memref<8x256xf32, #tpu.memory_space<vmem>>, %arg2: memref<8x2xf32, #tpu.memory_space<vmem>>, %arg3: memref<8x256xf32, #tpu.memory_space<vmem>>) attributes {dimension_semantics = [#tpu.dimension_semantics<parallel>], iteration_bounds = array<i64: 1>, scalar_prefetch = 0 : i64, scratch_operands = 0 : i64, tpu.core_type = #tpu.core_type<tc>, window_params = [{transform_indices = @transform_0, window_bounds = array<i64: 8, 256>}, {pipeline_mode = #tpu.pipeline_mode<synchronous>, transform_indices = @transform_1, window_bounds = array<i64: 8, 2>}, {transform_indices = @transform_2, window_bounds = array<i64: 8, 256>}]} {
    %c8_i32 = arith.constant 8 : i32
    %0 = arith.muli %arg0, %c8_i32 : i32
    %1 = tpu.assume_multiple %0, 8 : i32
    %2 = arith.index_cast %1 : i32 to index
    %c0 = arith.constant 0 : index
    %3 = vector.load %arg2[%2, %c0] : memref<8x2xf32, #tpu.memory_space<vmem>>, vector<8x2xf32>
    %4 = vector.extract_strided_slice %3 {offsets = [0, 0], sizes = [8, 1], strides = [1, 1]} : vector<8x2xf32> to vector<8x1xf32>
    %5 = vector.extract_strided_slice %3 {offsets = [0, 1], sizes = [8, 1], strides = [1, 1]} : vector<8x2xf32> to vector<8x1xf32>
    %c0_0 = arith.constant 0 : index
    %c0_1 = arith.constant 0 : index
    %6 = vector.load %arg1[%c0_0, %c0_1] : memref<8x256xf32, #tpu.memory_space<vmem>>, vector<8x256xf32>
    %cst = arith.constant dense<0.000000e+00> : vector<8xf32>
    %7 = vector.multi_reduction <add>, %6, %cst [1] : vector<8x256xf32> to vector<8xf32>
    %8 = vector.shape_cast %7 : vector<8xf32> to vector<8x1xf32>
    %cst_2 = arith.constant 3.906250e-03 : f32
    %9 = vector.broadcast %cst_2 : f32 to vector<8x1xf32>
    %10 = arith.mulf %8, %9 : vector<8x1xf32>
    %11 = vector.broadcast %10 : vector<8x1xf32> to vector<8x256xf32>
    %12 = arith.subf %6, %11 : vector<8x256xf32>
    %13 = arith.mulf %12, %12 : vector<8x256xf32>
    %cst_3 = arith.constant dense<0.000000e+00> : vector<8xf32>
    %14 = vector.multi_reduction <add>, %13, %cst_3 [1] : vector<8x256xf32> to vector<8xf32>
    %15 = vector.shape_cast %14 : vector<8xf32> to vector<8x1xf32>
    %cst_4 = arith.constant 3.906250e-03 : f32
    %16 = vector.broadcast %cst_4 : f32 to vector<8x1xf32>
    %17 = arith.mulf %15, %16 : vector<8x1xf32>
    %cst_5 = arith.constant 9.99999974E-6 : f32
    %18 = vector.broadcast %cst_5 : f32 to vector<8x1xf32>
    %19 = arith.addf %17, %18 : vector<8x1xf32>
    %20 = math.rsqrt %19 : vector<8x1xf32>
    %21 = arith.mulf %20, %4 : vector<8x1xf32>
    %22 = arith.mulf %10, %21 : vector<8x1xf32>
    %23 = arith.subf %5, %22 : vector<8x1xf32>
    %24 = vector.broadcast %21 : vector<8x1xf32> to vector<8x256xf32>
    %25 = arith.mulf %6, %24 : vector<8x256xf32>
    %26 = vector.broadcast %23 : vector<8x1xf32> to vector<8x256xf32>
    %27 = arith.addf %25, %26 : vector<8x256xf32>
    %c0_6 = arith.constant 0 : index
    %c0_7 = arith.constant 0 : index
    %28 = vector.load %arg3[%c0_6, %c0_7] : memref<8x256xf32, #tpu.memory_space<vmem>>, vector<8x256xf32>
    tpu.vector_store %arg3[%c0_6, %c0_7], %27 {strides = array<i32>} : memref<8x256xf32, #tpu.memory_space<vmem>>, vector<8x256xf32>,
    return
  }
  func.func @transform_0(%arg0: i32) -> (i32, i32) {
    %c0_i32 = arith.constant 0 : i32
    %c0_i32_0 = arith.constant 0 : i32
    return %arg0, %c0_i32 : i32, i32
  }
  func.func @transform_1(%arg0: i32) -> (i32, i32) {
    %c0_i32 = arith.constant 0 : i32
    %c0_i32_0 = arith.constant 0 : i32
    %c0_i32_1 = arith.constant 0 : i32
    return %c0_i32, %c0_i32_0 : i32, i32
  }
  func.func @transform_2(%arg0: i32) -> (i32, i32) {
    %c0_i32 = arith.constant 0 : i32
    %c0_i32_0 = arith.constant 0 : i32
    return %arg0, %c0_i32 : i32, i32
  }
}

</mosaic_0001>

<llo_original>
// kernel: tpu_custom_call.1
$region0: #{tpu_custom_call.1}
  #allocation0 [shape = 'u32[]', space=smem, size = 0x4, offset = 0x4, fixed_abs, tag = 'smem constant byte address 0x4 - core index']
  #allocation1 [shape = 'u32[144,128]{1,0:T(1,128)}', space=vmem, size = 0x12000, scoped, tag = 'internal scratch']
  %s0 = inlined_call_operand.hbm [shape: f32[8,256], index: 0, kind: input, shape index: {}]
  %s1 = inlined_call_operand.vmem [shape: f32[8,2], index: 1, kind: input, shape index: {}]
  %s2 = inlined_call_operand.hbm [shape: f32[8,256], index: 2, kind: output, shape index: {}]
  %s3 = sld [smem:[#allocation0]]
  $region22: #{tpu_custom_call.1} parent=0
    _
  %s5 = ssub.s32 1, %s3
  %s6 = scalar_select 0, %s5, %s3
  $region1: #{tpu_custom_call.1} parent=0
    #allocation2 [shape = 'u8[8192]{0}', space=vmem, size = 0x2000, scoped, tag = 'input window, operand 0, single buffered']
    #allocation3 [shape = 's32[1]{0}', space=sflag, size = 0x4, scoped, tag = 'scoped memory for tpu_custom_call.1']
    #allocation4 [shape = 's32[1]{0}', space=sflag, size = 0x4, scoped, tag = 'scoped memory for tpu_custom_call.1']
    #allocation5 [shape = 'u8[8192]{0}', space=vmem, size = 0x2000, scoped, tag = 'output window, operand 0, single buffered']
    %7 = vsyncpa [#allocation3], 0
    %8 = vsyncpa [#allocation4], 0
    // Predicated region
    $region2: #{tpu_custom_call.1} parent=1 // pred_check
      _
    $region3: #{tpu_custom_call.1} parent=1 // pred_check_branch
      %10 = sbr.rel (0) target = $region5
    $region4: #{tpu_custom_call.1} parent=1 // pred_region
      %s12 = ssub.s32 256, 256
      %13 = vsyncadd [#allocation3], %s12
      %s15 = sshll.u32 [#allocation2], 4
      %s16 = int_to_ptr.vmem [resolvable:$true] %s15
      %18 = dma.hbm_to_vmem [thread:$0]  %s0, 256, %s16, [#allocation3]
    $region5: #{tpu_custom_call.1} parent=1 // pred_fallthru
      _
    // Predicated region
    $region6: #{tpu_custom_call.1} parent=1 // pred_check
      _
    $region7: #{tpu_custom_call.1} parent=1 // pred_check_branch
      %20 = sbr.rel (0) target = $region9
    $region8: #{tpu_custom_call.1} parent=1 // pred_region
      _
    $region9: #{tpu_custom_call.1} parent=1 // pred_fallthru
      _
    // Predicated region
    $region10: #{tpu_custom_call.1} parent=1 // pred_check
      _
    $region11: #{tpu_custom_call.1} parent=1 // pred_check_branch
      %22 = sbr.rel (0) target = $region13
    $region12: #{tpu_custom_call.1} parent=1 // pred_region
      %23 = dma.done [#allocation3], 256
    $region13: #{tpu_custom_call.1} parent=1 // pred_fallthru
      _
    %s24 = smul.u32 0, 8
    %s25 = scalar_lea.vmem %s1, %s24
    %v26 = vld [vmem:[%s25] sm:$0xff]
    %v27 = vld [vmem:[#allocation2] sm:$0xff]
    %v28 = vld [vmem:[#allocation2 + $0x8] sm:$0xff]
    %v29 = vadd.f32 %v27, %v28
    %30 = vadd.xlane.f32.xlu0 %v29
    %v31 = vpop.xlane.xlu0 %30
    %v32 = vmul.f32 %v31, 0.00390625
    %v33 = vsub.f32 %v27, %v32
    %v34 = vsub.f32 %v28, %v32
    %v35 = vmul.f32 %v33, %v33
    %v36 = vmul.f32 %v34, %v34
    %v37 = vadd.f32 %v35, %v36
    %38 = vadd.xlane.f32.xlu0 %v37
    %v39 = vpop.xlane.xlu0 %38
    %v40 = vmul.f32 %v39, 0.00390625
    %v41 = vadd.f32 %v40, 1e-05
    %v42 = vrsqrt.pop %v41
    %v43 = vmul.f32 %v42, %v26
    %v44 = vmul.f32 %v32, %v43
    %46 = vrot.lane.b32.xlu0 %v44, 1
    %v47 = vpop.permute.xlu0 %46
    %v49 = vsub.f32 %v26, %v47
    %51 = vset.pattern.permute.xlu0 0
    %52 = vperm.xlu0 %51, %v43
    %v53 = vpop.permute.xlu0 %52
    %v55 = vmul.f32 %v27, %v53
    %v56 = vmul.f32 %v28, %v53
    %58 = vset.pattern.permute.xlu0 1
    %59 = vperm.xlu0 %58, %v49
    %v60 = vpop.permute.xlu0 %59
    %v62 = vadd.f32 %v55, %v60
    %v63 = vadd.f32 %v56, %v60
    %64 = vst [vmem:[#allocation5] sm:$0xff] %v62
    %65 = vst [vmem:[#allocation5 + $0x8] sm:$0xff] %v63
    // Predicated region
    $region14: #{tpu_custom_call.1} parent=1 // pred_check
      _
    $region15: #{tpu_custom_call.1} parent=1 // pred_check_branch
      %67 = sbr.rel (0) target = $region17
    $region16: #{tpu_custom_call.1} parent=1 // pred_region
      %s69 = ssub.s32 256, 256
      %70 = vsyncadd [#allocation4], %s69
      %s72 = sshll.u32 [#allocation5], 4
      %s73 = int_to_ptr.vmem [resolvable:$true] %s72
      %75 = dma.vmem_to_hbm [thread:$0]  %s73, 256, %s2, [#allocation4]
    $region17: #{tpu_custom_call.1} parent=1 // pred_fallthru
      _
    // Predicated region
    $region18: #{tpu_custom_call.1} parent=1 // pred_check
      _
    $region19: #{tpu_custom_call.1} parent=1 // pred_check_branch
      %77 = sbr.rel (0) target = $region21
    $region20: #{tpu_custom_call.1} parent=1 // pred_region
      %78 = dma.done [#allocation4], 256
    $region21: #{tpu_custom_call.1} parent=1 // pred_fallthru
      _
    %79 = vsyncpa [#allocation3], 1
    %80 = vsyncpa [#allocation4], 1

</llo_original>
